<compile_context>
chip_gen: v7x
topology: tpu7x:2x2x1
jax: 0.10.0
libtpu: 0.0.40
codegen_flags: <defaults>
</compile_context>

<pallas_src>
from functools import partial

import jax
import jax.numpy as jnp
from jax.experimental import pallas as pl
from jax.experimental.pallas import tpu as pltpu


IN_FEATURES = 4
HIDDEN = 10

# Packed parameter layout inside one (24, 128) f32 block:
#   rows [0:4),   cols [0:10)   W1^T   (W1T[k, j] = W1[j, k])
#   row   4,      cols [0:10)   b1
#   rows [8:18),  cols [0:A)    W2^T   (W2T[k, i] = W2[i, k])
#   row  18,      cols [0:A)    b2
PARAM_ROWS, PARAM_COLS = 24, 128
ROW_B1 = IN_FEATURES            # 4
ROW_W2T = 8
ROW_B2 = ROW_W2T + HIDDEN       # 18

MAX_BATCH = 32768               # keeps the grid-less kernel comfortably in VMEM


def policy_net_kernel(x_ref, params_ref, act_ref, prob_ref):
    x = x_ref[...]              # (B, 4)   f32, native PyTorch layout
    p = params_ref[...]         # (24,128) packed parameters
    n_act = act_ref.shape[1]    # static

    # ---- Layer 1: h = LeakyReLU(x @ W1^T + b1), unrolled VPU FMAs ----
    # h[b, j] = b1[j] + sum_k x[b, k] * W1T[k, j]
    h = p[ROW_B1:ROW_B1 + 1, 0:HIDDEN] + x[:, 0:1] * p[0:1, 0:HIDDEN]
    for k in range(1, IN_FEATURES):
        h = h + x[:, k:k + 1] * p[k:k + 1, 0:HIDDEN]
    h = jnp.where(h > 0, h, 0.01 * h)          # LeakyReLU, PyTorch default slope

    # ---- Layer 2: a = h @ W2^T + b2, unrolled VPU FMAs ----
    a = p[ROW_B2:ROW_B2 + 1, 0:n_act] + h[:, 0:1] * p[ROW_W2T:ROW_W2T + 1, 0:n_act]
    for k in range(1, HIDDEN):
        a = a + h[:, k:k + 1] * p[ROW_W2T + k:ROW_W2T + k + 1, 0:n_act]
    act_ref[...] = a                           # (B, A)

    # ---- Softmax over dim=0 (the batch axis), exactly as the PyTorch module ----
    m = jnp.max(a, axis=0, keepdims=True)
    e = jnp.exp(a - m)
    denom = jnp.sum(e, axis=0, keepdims=True)
    prob_ref[...] = e / denom                  # exact divide (see correctness fix)


@partial(jax.jit, static_argnames=("n_actions",))
def policy_net_forward(x, packed_params, n_actions):
    """x: (B, 4) f32; packed_params: (24, 128) f32 from pack_params().

    Returns (all_act, all_act_prob), each (B, n_actions), matching PyTorch.
    """
    batch = x.shape[0]
    assert batch <= MAX_BATCH, "grid-less kernel: batch too large for VMEM-resident softmax"

    vmem = pl.BlockSpec(memory_space=pltpu.MemorySpace.VMEM)
    flops = batch * (2 * IN_FEATURES * HIDDEN + 2 * HIDDEN * n_actions
                     + 2 * HIDDEN + 5 * n_actions)
    bytes_accessed = 4 * (batch * IN_FEATURES + PARAM_ROWS * PARAM_COLS
                          + 2 * batch * n_actions)
    all_act, all_act_prob = pl.pallas_call(
        policy_net_kernel,
        out_shape=(
            jax.ShapeDtypeStruct((batch, n_actions), jnp.float32),  # all_act
            jax.ShapeDtypeStruct((batch, n_actions), jnp.float32),  # all_act_prob
        ),
        in_specs=[vmem, vmem],
        out_specs=(vmem, vmem),
        cost_estimate=pl.CostEstimate(
            flops=flops,
            transcendentals=batch * n_actions,
            bytes_accessed=bytes_accessed,
        ),
    )(x, packed_params)
    return all_act, all_act_prob


def init_params(key, n_actions):
    """PyTorch-style init: U(-1/sqrt(fan_in), +1/sqrt(fan_in)), PyTorch layouts."""
    k1, k2, k3, k4 = jax.random.split(key, 4)
    lim1 = 1.0 / jnp.sqrt(float(IN_FEATURES))
    lim2 = 1.0 / jnp.sqrt(float(HIDDEN))
    w1 = jax.random.uniform(k1, (HIDDEN, IN_FEATURES), jnp.float32, -lim1, lim1)
    b1 = jax.random.uniform(k2, (HIDDEN,), jnp.float32, -lim1, lim1)
    w2 = jax.random.uniform(k3, (n_actions, HIDDEN), jnp.float32, -lim2, lim2)
    b2 = jax.random.uniform(k4, (n_actions,), jnp.float32, -lim2, lim2)
    return w1, b1, w2, b2


def pack_params(w1, b1, w2, b2):
    """Pack PyTorch-layout params into one (24, 128) f32 block (done once)."""
    n_actions = w2.shape[0]
    assert n_actions <= PARAM_COLS, f"n_actions must be <= {PARAM_COLS}"
    assert w1.shape == (HIDDEN, IN_FEATURES) and b1.shape == (HIDDEN,)
    assert w2.shape == (n_actions, HIDDEN) and b2.shape == (n_actions,)
    p = jnp.zeros((PARAM_ROWS, PARAM_COLS), jnp.float32)
    p = p.at[0:IN_FEATURES, 0:HIDDEN].set(w1.T)                  # W1^T
    p = p.at[ROW_B1, 0:HIDDEN].set(b1)                           # b1
    p = p.at[ROW_W2T:ROW_W2T + HIDDEN, 0:n_actions].set(w2.T)    # W2^T
    p = p.at[ROW_B2, 0:n_actions].set(b2)                        # b2
    return p


def reference_forward(x, w1, b1, w2, b2):
    """Pure-JAX reference matching the PyTorch module semantics."""
    h = x @ w1.T + b1
    h = jnp.where(h > 0, h, 0.01 * h)
    a = h @ w2.T + b2
    prob = jax.nn.softmax(a, axis=0)           # Softmax(dim=0) == over batch
    return a, prob


if __name__ == "__main__":
    key = jax.random.PRNGKey(0)
    k_x, k_p = jax.random.split(key)

    batch = 8
    n_actions = 2

    x = jax.random.normal(k_x, (batch, IN_FEATURES), jnp.float32)
    w1, b1, w2, b2 = init_params(k_p, n_actions)
    packed = pack_params(w1, b1, w2, b2)

    all_act, all_act_prob = policy_net_forward(x, packed, n_actions)
    jax.block_until_ready((all_act, all_act_prob))

    ref_act, ref_prob = reference_forward(x, w1, b1, w2, b2)
    assert all_act.shape == (batch, n_actions)
    assert all_act_prob.shape == (batch, n_actions)
    assert jnp.allclose(all_act, ref_act, atol=1e-5, rtol=1e-5)
    assert jnp.allclose(all_act_prob, ref_prob, atol=1e-5, rtol=1e-5)
    # probabilities along dim=0 sum to 1 per action column
    assert jnp.allclose(jnp.sum(all_act_prob, axis=0), 1.0, atol=1e-5)

    print("KERNEL_OK")
</pallas_src>

<mosaic_0001>
module attributes {stable_mosaic.version = 11 : i64} {
  func.func @policy_net_kernel(%arg0: memref<8x4xf32, #tpu.memory_space<vmem>>, %arg1: memref<24x128xf32, #tpu.memory_space<vmem>>, %arg2: memref<8x2xf32, #tpu.memory_space<vmem>>, %arg3: memref<8x2xf32, #tpu.memory_space<vmem>>) attributes {dimension_semantics = [], scalar_prefetch = 0 : i64, scratch_operands = 0 : i64, tpu.core_type = #tpu.core_type<tc>} {
    %c0 = arith.constant 0 : index
    %c0_0 = arith.constant 0 : index
    %0 = vector.load %arg0[%c0, %c0_0] : memref<8x4xf32, #tpu.memory_space<vmem>>, vector<8x4xf32>
    %c0_1 = arith.constant 0 : index
    %c0_2 = arith.constant 0 : index
    %1 = vector.load %arg1[%c0_1, %c0_2] : memref<24x128xf32, #tpu.memory_space<vmem>>, vector<24x128xf32>
    %2 = vector.extract_strided_slice %1 {offsets = [4, 0], sizes = [1, 10], strides = [1, 1]} : vector<24x128xf32> to vector<1x10xf32>
    %3 = vector.extract_strided_slice %0 {offsets = [0, 0], sizes = [8, 1], strides = [1, 1]} : vector<8x4xf32> to vector<8x1xf32>
    %4 = vector.extract_strided_slice %1 {offsets = [0, 0], sizes = [1, 10], strides = [1, 1]} : vector<24x128xf32> to vector<1x10xf32>
    %5 = vector.broadcast %3 : vector<8x1xf32> to vector<8x10xf32>
    %6 = vector.broadcast %4 : vector<1x10xf32> to vector<8x10xf32>
    %7 = arith.mulf %5, %6 : vector<8x10xf32>
    %8 = vector.broadcast %2 : vector<1x10xf32> to vector<8x10xf32>
    %9 = arith.addf %8, %7 : vector<8x10xf32>
    %10 = vector.extract_strided_slice %0 {offsets = [0, 1], sizes = [8, 1], strides = [1, 1]} : vector<8x4xf32> to vector<8x1xf32>
    %11 = vector.extract_strided_slice %1 {offsets = [1, 0], sizes = [1, 10], strides = [1, 1]} : vector<24x128xf32> to vector<1x10xf32>
    %12 = vector.broadcast %10 : vector<8x1xf32> to vector<8x10xf32>
    %13 = vector.broadcast %11 : vector<1x10xf32> to vector<8x10xf32>
    %14 = arith.mulf %12, %13 : vector<8x10xf32>
    %15 = arith.addf %9, %14 : vector<8x10xf32>
    %16 = vector.extract_strided_slice %0 {offsets = [0, 2], sizes = [8, 1], strides = [1, 1]} : vector<8x4xf32> to vector<8x1xf32>
    %17 = vector.extract_strided_slice %1 {offsets = [2, 0], sizes = [1, 10], strides = [1, 1]} : vector<24x128xf32> to vector<1x10xf32>
    %18 = vector.broadcast %16 : vector<8x1xf32> to vector<8x10xf32>
    %19 = vector.broadcast %17 : vector<1x10xf32> to vector<8x10xf32>
    %20 = arith.mulf %18, %19 : vector<8x10xf32>
    %21 = arith.addf %15, %20 : vector<8x10xf32>
    %22 = vector.extract_strided_slice %0 {offsets = [0, 3], sizes = [8, 1], strides = [1, 1]} : vector<8x4xf32> to vector<8x1xf32>
    %23 = vector.extract_strided_slice %1 {offsets = [3, 0], sizes = [1, 10], strides = [1, 1]} : vector<24x128xf32> to vector<1x10xf32>
    %24 = vector.broadcast %22 : vector<8x1xf32> to vector<8x10xf32>
    %25 = vector.broadcast %23 : vector<1x10xf32> to vector<8x10xf32>
    %26 = arith.mulf %24, %25 : vector<8x10xf32>
    %27 = arith.addf %21, %26 : vector<8x10xf32>
    %cst = arith.constant 0.000000e+00 : f32
    %28 = vector.broadcast %cst : f32 to vector<8x10xf32>
    %29 = arith.cmpf ogt, %27, %28 : vector<8x10xf32>
    %cst_3 = arith.constant 0.00999999977 : f32
    %30 = vector.broadcast %cst_3 : f32 to vector<8x10xf32>
    %31 = arith.mulf %30, %27 : vector<8x10xf32>
    %32 = arith.select %29, %27, %31 : vector<8x10xi1>, vector<8x10xf32>
    %33 = vector.extract_strided_slice %1 {offsets = [18, 0], sizes = [1, 2], strides = [1, 1]} : vector<24x128xf32> to vector<1x2xf32>
    %34 = vector.extract_strided_slice %32 {offsets = [0, 0], sizes = [8, 1], strides = [1, 1]} : vector<8x10xf32> to vector<8x1xf32>
    %35 = vector.extract_strided_slice %1 {offsets = [8, 0], sizes = [1, 2], strides = [1, 1]} : vector<24x128xf32> to vector<1x2xf32>
    %36 = vector.broadcast %34 : vector<8x1xf32> to vector<8x2xf32>
    %37 = vector.broadcast %35 : vector<1x2xf32> to vector<8x2xf32>
    %38 = arith.mulf %36, %37 : vector<8x2xf32>
    %39 = vector.broadcast %33 : vector<1x2xf32> to vector<8x2xf32>
    %40 = arith.addf %39, %38 : vector<8x2xf32>
    %41 = vector.extract_strided_slice %32 {offsets = [0, 1], sizes = [8, 1], strides = [1, 1]} : vector<8x10xf32> to vector<8x1xf32>
    %42 = vector.extract_strided_slice %1 {offsets = [9, 0], sizes = [1, 2], strides = [1, 1]} : vector<24x128xf32> to vector<1x2xf32>
    %43 = vector.broadcast %41 : vector<8x1xf32> to vector<8x2xf32>
    %44 = vector.broadcast %42 : vector<1x2xf32> to vector<8x2xf32>
    %45 = arith.mulf %43, %44 : vector<8x2xf32>
    %46 = arith.addf %40, %45 : vector<8x2xf32>
    %47 = vector.extract_strided_slice %32 {offsets = [0, 2], sizes = [8, 1], strides = [1, 1]} : vector<8x10xf32> to vector<8x1xf32>
    %48 = vector.extract_strided_slice %1 {offsets = [10, 0], sizes = [1, 2], strides = [1, 1]} : vector<24x128xf32> to vector<1x2xf32>
    %49 = vector.broadcast %47 : vector<8x1xf32> to vector<8x2xf32>
    %50 = vector.broadcast %48 : vector<1x2xf32> to vector<8x2xf32>
    %51 = arith.mulf %49, %50 : vector<8x2xf32>
    %52 = arith.addf %46, %51 : vector<8x2xf32>
    %53 = vector.extract_strided_slice %32 {offsets = [0, 3], sizes = [8, 1], strides = [1, 1]} : vector<8x10xf32> to vector<8x1xf32>
    %54 = vector.extract_strided_slice %1 {offsets = [11, 0], sizes = [1, 2], strides = [1, 1]} : vector<24x128xf32> to vector<1x2xf32>
    %55 = vector.broadcast %53 : vector<8x1xf32> to vector<8x2xf32>
    %56 = vector.broadcast %54 : vector<1x2xf32> to vector<8x2xf32>
    %57 = arith.mulf %55, %56 : vector<8x2xf32>
    %58 = arith.addf %52, %57 : vector<8x2xf32>
    %59 = vector.extract_strided_slice %32 {offsets = [0, 4], sizes = [8, 1], strides = [1, 1]} : vector<8x10xf32> to vector<8x1xf32>
    %60 = vector.extract_strided_slice %1 {offsets = [12, 0], sizes = [1, 2], strides = [1, 1]} : vector<24x128xf32> to vector<1x2xf32>
    %61 = vector.broadcast %59 : vector<8x1xf32> to vector<8x2xf32>
    %62 = vector.broadcast %60 : vector<1x2xf32> to vector<8x2xf32>
    %63 = arith.mulf %61, %62 : vector<8x2xf32>
    %64 = arith.addf %58, %63 : vector<8x2xf32>
    %65 = vector.extract_strided_slice %32 {offsets = [0, 5], sizes = [8, 1], strides = [1, 1]} : vector<8x10xf32> to vector<8x1xf32>
    %66 = vector.extract_strided_slice %1 {offsets = [13, 0], sizes = [1, 2], strides = [1, 1]} : vector<24x128xf32> to vector<1x2xf32>
    %67 = vector.broadcast %65 : vector<8x1xf32> to vector<8x2xf32>
    %68 = vector.broadcast %66 : vector<1x2xf32> to vector<8x2xf32>
    %69 = arith.mulf %67, %68 : vector<8x2xf32>
    %70 = arith.addf %64, %69 : vector<8x2xf32>
    %71 = vector.extract_strided_slice %32 {offsets = [0, 6], sizes = [8, 1], strides = [1, 1]} : vector<8x10xf32> to vector<8x1xf32>
    %72 = vector.extract_strided_slice %1 {offsets = [14, 0], sizes = [1, 2], strides = [1, 1]} : vector<24x128xf32> to vector<1x2xf32>
    %73 = vector.broadcast %71 : vector<8x1xf32> to vector<8x2xf32>
    %74 = vector.broadcast %72 : vector<1x2xf32> to vector<8x2xf32>
    %75 = arith.mulf %73, %74 : vector<8x2xf32>
    %76 = arith.addf %70, %75 : vector<8x2xf32>
    %77 = vector.extract_strided_slice %32 {offsets = [0, 7], sizes = [8, 1], strides = [1, 1]} : vector<8x10xf32> to vector<8x1xf32>
    %78 = vector.extract_strided_slice %1 {offsets = [15, 0], sizes = [1, 2], strides = [1, 1]} : vector<24x128xf32> to vector<1x2xf32>
    %79 = vector.broadcast %77 : vector<8x1xf32> to vector<8x2xf32>
    %80 = vector.broadcast %78 : vector<1x2xf32> to vector<8x2xf32>
    %81 = arith.mulf %79, %80 : vector<8x2xf32>
    %82 = arith.addf %76, %81 : vector<8x2xf32>
    %83 = vector.extract_strided_slice %32 {offsets = [0, 8], sizes = [8, 1], strides = [1, 1]} : vector<8x10xf32> to vector<8x1xf32>
    %84 = vector.extract_strided_slice %1 {offsets = [16, 0], sizes = [1, 2], strides = [1, 1]} : vector<24x128xf32> to vector<1x2xf32>
    %85 = vector.broadcast %83 : vector<8x1xf32> to vector<8x2xf32>
    %86 = vector.broadcast %84 : vector<1x2xf32> to vector<8x2xf32>
    %87 = arith.mulf %85, %86 : vector<8x2xf32>
    %88 = arith.addf %82, %87 : vector<8x2xf32>
    %89 = vector.extract_strided_slice %32 {offsets = [0, 9], sizes = [8, 1], strides = [1, 1]} : vector<8x10xf32> to vector<8x1xf32>
    %90 = vector.extract_strided_slice %1 {offsets = [17, 0], sizes = [1, 2], strides = [1, 1]} : vector<24x128xf32> to vector<1x2xf32>
    %91 = vector.broadcast %89 : vector<8x1xf32> to vector<8x2xf32>
    %92 = vector.broadcast %90 : vector<1x2xf32> to vector<8x2xf32>
    %93 = arith.mulf %91, %92 : vector<8x2xf32>
    %94 = arith.addf %88, %93 : vector<8x2xf32>
    %c0_4 = arith.constant 0 : index
    %c0_5 = arith.constant 0 : index
    %95 = vector.load %arg2[%c0_4, %c0_5] : memref<8x2xf32, #tpu.memory_space<vmem>>, vector<8x2xf32>
    tpu.vector_store %arg2[%c0_4, %c0_5], %94 {strides = array<i32>} : memref<8x2xf32, #tpu.memory_space<vmem>>, vector<8x2xf32>,
    %cst_6 = arith.constant dense<0xFF800000> : vector<2xf32>
    %96 = vector.multi_reduction <maximumf>, %94, %cst_6 [0] : vector<8x2xf32> to vector<2xf32>
    %97 = vector.shape_cast %96 : vector<2xf32> to vector<1x2xf32>
    %98 = vector.broadcast %97 : vector<1x2xf32> to vector<8x2xf32>
    %99 = arith.subf %94, %98 : vector<8x2xf32>
    %100 = math.exp %99 : vector<8x2xf32>
    %cst_7 = arith.constant dense<0.000000e+00> : vector<2xf32>
    %101 = vector.multi_reduction <add>, %100, %cst_7 [0] : vector<8x2xf32> to vector<2xf32>
    %102 = vector.shape_cast %101 : vector<2xf32> to vector<1x2xf32>
    %103 = vector.broadcast %102 : vector<1x2xf32> to vector<8x2xf32>
    %104 = arith.divf %100, %103 : vector<8x2xf32>
    %c0_8 = arith.constant 0 : index
    %c0_9 = arith.constant 0 : index
    %105 = vector.load %arg3[%c0_8, %c0_9] : memref<8x2xf32, #tpu.memory_space<vmem>>, vector<8x2xf32>
    tpu.vector_store %arg3[%c0_8, %c0_9], %104 {strides = array<i32>} : memref<8x2xf32, #tpu.memory_space<vmem>>, vector<8x2xf32>,
    return
  }
}

</mosaic_0001>

<llo_original>
// kernel: policy_net_forward.1
$region0: #{policy_net_forward.1}
  #allocation0 [shape = 'u32[]', space=smem, size = 0x4, offset = 0x4, fixed_abs, tag = 'smem constant byte address 0x4 - core index']
  #allocation1 [shape = 'u32[144,128]{1,0:T(1,128)}', space=vmem, size = 0x12000, scoped, tag = 'internal scratch']
  %s0 = inlined_call_operand.vmem [shape: f32[8,4], index: 0, kind: input, shape index: {}]
  %s1 = inlined_call_operand.hbm [shape: f32[24,128], index: 1, kind: input, shape index: {}]
  %s2 = inlined_call_operand.vmem [shape: f32[8,2], index: 2, kind: output, shape index: {0}]
  %s3 = inlined_call_operand.vmem [shape: f32[8,2], index: 3, kind: output, shape index: {1}]
  %4 = xla_tuple %s2, %s3
  %s5 = sld [smem:[#allocation0]]
  $region30: #{policy_net_forward.1} parent=0
    _
  %s7 = ssub.s32 1, %s5
  %s8 = scalar_select 0, %s7, %s5
  $region1: #{policy_net_forward.1} parent=0
    #allocation2 [shape = 'u8[12288]{0}', space=vmem, size = 0x3000, scoped, tag = 'input window, operand 1, single buffered']
    #allocation3 [shape = 's32[1]{0}', space=sflag, size = 0x4, scoped, tag = 'scoped memory for policy_net_forward.1']
    %9 = vsyncpa [#allocation3], 0
    // Predicated region
    $region2: #{policy_net_forward.1} parent=1 // pred_check
      _
    $region3: #{policy_net_forward.1} parent=1 // pred_check_branch
      %11 = sbr.rel (0) target = $region5
    $region4: #{policy_net_forward.1} parent=1 // pred_region
      _
    $region5: #{policy_net_forward.1} parent=1 // pred_fallthru
      _
    // Predicated region
    $region6: #{policy_net_forward.1} parent=1 // pred_check
      _
    $region7: #{policy_net_forward.1} parent=1 // pred_check_branch
      %13 = sbr.rel (0) target = $region9
    $region8: #{policy_net_forward.1} parent=1 // pred_region
      %s15 = ssub.s32 384, 384
      %16 = vsyncadd [#allocation3], %s15
      %s17 = sshll.u32 [#allocation2], 4
      %s18 = int_to_ptr.vmem [resolvable:$true] %s17
      %23 = dma.hbm_to_vmem [thread:$0]  %s1, 384, %s18, [#allocation3], 128, 128, 8
    $region9: #{policy_net_forward.1} parent=1 // pred_fallthru
      _
    // Predicated region
    $region10: #{policy_net_forward.1} parent=1 // pred_check
      _
    $region11: #{policy_net_forward.1} parent=1 // pred_check_branch
      %25 = sbr.rel (0) target = $region13
    $region12: #{policy_net_forward.1} parent=1 // pred_region
      %26 = dma.done [#allocation3], 384
    $region13: #{policy_net_forward.1} parent=1 // pred_fallthru
      _
    %v27 = vld [vmem:[%s0] sm:$0xff]
    %v28 = vld [vmem:[#allocation2] sm:$0xff]
    %v29 = vld [vmem:[#allocation2 + $0x8] sm:$0xff]
    %v30 = vld [vmem:[#allocation2 + $0x10] sm:$0xff]
    %32 = vset.pattern.permute.xlu0 0
    %33 = vperm.xlu0 %32, %v27
    %v34 = vpop.permute.xlu0 %33
    %v36 = vlaneseq
    %v37 = vshrl.u32 %v36, 7
    %v38 = vsub.s32 0, %v37
    %v39 = vrot.slane %v28, %v38
    %v40 = vmul.f32 %v34, %v39
    %v41 = vlaneseq
    %v42 = vshrl.u32 %v41, 7
    %v43 = vsub.s32 4, %v42
    %v44 = vrot.slane %v28, %v43
    %v45 = vadd.f32 %v44, %v40
    %46 = vset.pattern.permute.xlu0 1
    %47 = vperm.xlu0 %46, %v27
    %v48 = vpop.permute.xlu0 %47
    %v50 = vlaneseq
    %v51 = vshrl.u32 %v50, 7
    %v52 = vsub.s32 1, %v51
    %v53 = vrot.slane %v28, %v52
    %v54 = vmul.f32 %v48, %v53
    %v55 = vadd.f32 %v45, %v54
    %56 = vset.pattern.permute.xlu0 2
    %57 = vperm.xlu0 %56, %v27
    %v58 = vpop.permute.xlu0 %57
    %v60 = vlaneseq
    %v61 = vshrl.u32 %v60, 7
    %v62 = vsub.s32 2, %v61
    %v63 = vrot.slane %v28, %v62
    %v64 = vmul.f32 %v58, %v63
    %v65 = vadd.f32 %v55, %v64
    %66 = vset.pattern.permute.xlu0 3
    %67 = vperm.xlu0 %66, %v27
    %v68 = vpop.permute.xlu0 %67
    %v70 = vlaneseq
    %v71 = vshrl.u32 %v70, 7
    %v72 = vsub.s32 3, %v71
    %v73 = vrot.slane %v28, %v72
    %v74 = vmul.f32 %v68, %v73
    %v75 = vadd.f32 %v65, %v74
    %vm76 = vcmp.gt.f32.partialorder %v75, 0.0
    %v77 = vmul.f32 %v75, 0.01
    %v78 = vsel %vm76, %v75, %v77
    %80 = vset.pattern.permute.xlu0 0
    %81 = vperm.xlu0 %80, %v78
    %v82 = vpop.permute.xlu0 %81
    %v84 = vlaneseq
    %v85 = vshrl.u32 %v84, 7
    %v86 = vsub.s32 0, %v85
    %v87 = vrot.slane %v29, %v86
    %v88 = vmul.f32 %v82, %v87
    %v89 = vlaneseq
    %v90 = vshrl.u32 %v89, 7
    %v91 = vsub.s32 2, %v90
    %v92 = vrot.slane %v30, %v91
    %v93 = vadd.f32 %v92, %v88
    %94 = vset.pattern.permute.xlu0 1
    %95 = vperm.xlu0 %94, %v78
    %v96 = vpop.permute.xlu0 %95
    %v98 = vlaneseq
    %v99 = vshrl.u32 %v98, 7
    %v100 = vsub.s32 1, %v99
    %v101 = vrot.slane %v29, %v100
    %v102 = vmul.f32 %v96, %v101
    %v103 = vadd.f32 %v93, %v102
    %104 = vset.pattern.permute.xlu0 2
    %105 = vperm.xlu0 %104, %v78
    %v106 = vpop.permute.xlu0 %105
    %v108 = vlaneseq
    %v109 = vshrl.u32 %v108, 7
    %v110 = vsub.s32 2, %v109
    %v111 = vrot.slane %v29, %v110
    %v112 = vmul.f32 %v106, %v111
    %v113 = vadd.f32 %v103, %v112
    %114 = vset.pattern.permute.xlu0 3
    %115 = vperm.xlu0 %114, %v78
    %v116 = vpop.permute.xlu0 %115
    %v118 = vlaneseq
    %v119 = vshrl.u32 %v118, 7
    %v120 = vsub.s32 3, %v119
    %v121 = vrot.slane %v29, %v120
    %v122 = vmul.f32 %v116, %v121
    %v123 = vadd.f32 %v113, %v122
    %124 = vset.pattern.permute.xlu0 4
    %125 = vperm.xlu0 %124, %v78
    %v126 = vpop.permute.xlu0 %125
    %v128 = vlaneseq
    %v129 = vshrl.u32 %v128, 7
    %v130 = vsub.s32 4, %v129
    %v131 = vrot.slane %v29, %v130
    %v132 = vmul.f32 %v126, %v131
    %v133 = vadd.f32 %v123, %v132
    %134 = vset.pattern.permute.xlu0 5
    %135 = vperm.xlu0 %134, %v78
    %v136 = vpop.permute.xlu0 %135
    %v138 = vlaneseq
    %v139 = vshrl.u32 %v138, 7
    %v140 = vsub.s32 5, %v139
    %v141 = vrot.slane %v29, %v140
    %v142 = vmul.f32 %v136, %v141
    %v143 = vadd.f32 %v133, %v142
    %144 = vset.pattern.permute.xlu0 6
    %145 = vperm.xlu0 %144, %v78
    %v146 = vpop.permute.xlu0 %145
    %v148 = vlaneseq
    %v149 = vshrl.u32 %v148, 7
    %v150 = vsub.s32 6, %v149
    %v151 = vrot.slane %v29, %v150
    %v152 = vmul.f32 %v146, %v151
    %v153 = vadd.f32 %v143, %v152
    %154 = vset.pattern.permute.xlu0 7
    %155 = vperm.xlu0 %154, %v78
    %v156 = vpop.permute.xlu0 %155
    %v158 = vlaneseq
    %v159 = vshrl.u32 %v158, 7
    %v160 = vsub.s32 7, %v159
    %v161 = vrot.slane %v29, %v160
    %v162 = vmul.f32 %v156, %v161
    %v163 = vadd.f32 %v153, %v162
    %164 = vset.pattern.permute.xlu0 8
    %165 = vperm.xlu0 %164, %v78
    %v166 = vpop.permute.xlu0 %165
    %v168 = vlaneseq
    %v169 = vshrl.u32 %v168, 7
    %v170 = vsub.s32 0, %v169
    %v171 = vrot.slane %v30, %v170
    %v172 = vmul.f32 %v166, %v171
    %v173 = vadd.f32 %v163, %v172
    %174 = vset.pattern.permute.xlu0 9
    %175 = vperm.xlu0 %174, %v78
    %v176 = vpop.permute.xlu0 %175
    %v178 = vlaneseq
    %v179 = vshrl.u32 %v178, 7
    %v180 = vsub.s32 1, %v179
    %v181 = vrot.slane %v30, %v180
    %v182 = vmul.f32 %v176, %v181
    %v183 = vadd.f32 %v173, %v182
    %vm184 = vcmask 15360
    %185 = vst.msk [vmem:[%s2] sm:$0xff] %vm184, %v183
    %v186 = vsel %vm184, %v183, -inf
    %v187 = vrot.slane %v186, 4
    %v188 = vmax.f32 %v186, %v187
    %v189 = vrot.slane %v188, 2
    %v190 = vmax.f32 %v188, %v189
    %v191 = vrot.slane %v190, 1
    %v192 = vmax.f32 %v190, %v191
    %v193 = vsub.f32 %v183, %v192
    %v194 = vmul.f32 %v193, 1.442695
    %v195 = vpow.pop %v194
    %v196 = vsel %vm184, %v195, 0.0
    %v197 = vrot.slane %v196, 4
    %v198 = vadd.f32 %v196, %v197
    %v199 = vrot.slane %v198, 2
    %v200 = vadd.f32 %v198, %v199
    %v201 = vrot.slane %v200, 1
    %v202 = vadd.f32 %v200, %v201
    %v203 = vrcp.pop %v202
    %v204 = vmul.f32 %v195, %v203
    %205 = vst.msk [vmem:[%s3] sm:$0xff] %vm184, %v204
    // Predicated region
    $region14: #{policy_net_forward.1} parent=1 // pred_check
      _
    $region15: #{policy_net_forward.1} parent=1 // pred_check_branch
      %207 = sbr.rel (0) target = $region17
    $region16: #{policy_net_forward.1} parent=1 // pred_region
      _
    $region17: #{policy_net_forward.1} parent=1 // pred_fallthru
      _
    // Predicated region
    $region18: #{policy_net_forward.1} parent=1 // pred_check
      _
    $region19: #{policy_net_forward.1} parent=1 // pred_check_branch
      %209 = sbr.rel (0) target = $region21
    $region20: #{policy_net_forward.1} parent=1 // pred_region
      _
    $region21: #{policy_net_forward.1} parent=1 // pred_fallthru
      _
    // Predicated region
    $region22: #{policy_net_forward.1} parent=1 // pred_check
      _
    $region23: #{policy_net_forward.1} parent=1 // pred_check_branch
      %211 = sbr.rel (0) target = $region25
    $region24: #{policy_net_forward.1} parent=1 // pred_region
      _
    $region25: #{policy_net_forward.1} parent=1 // pred_fallthru
      _
    // Predicated region
    $region26: #{policy_net_forward.1} parent=1 // pred_check
      _
    $region27: #{policy_net_forward.1} parent=1 // pred_check_branch
      %213 = sbr.rel (0) target = $region29
    $region28: #{policy_net_forward.1} parent=1 // pred_region
      _
    $region29: #{policy_net_forward.1} parent=1 // pred_fallthru
      _
    %214 = vsyncpa [#allocation3], 1

</llo_original>
